<compile_context>
chip_gen: v5e
topology: v5e:2x2
jax: 0.10.0
libtpu: 0.0.40
codegen_flags: <defaults>
</compile_context>

<pallas_src>
import functools

import jax
import jax.numpy as jnp
from jax.experimental import pallas as pl
from jax.experimental.pallas import tpu as pltpu

_LANE = 128
_SUBLANE = 8


def _round_up(x, m):
    return (x + m - 1) // m * m


def _policy_kernel(obs_ref, w1_ref, b1_ref, w2_ref, b2_ref, w3_ref, b3_ref, out_ref):
    # Layer 1: Linear + Tanh. K = true obs_dim (unpadded), N = hid_pad lanes.
    h1 = jnp.tanh(
        jnp.dot(obs_ref[...], w1_ref[...], preferred_element_type=jnp.float32)
        + b1_ref[...]
    )
    # Layer 2: Linear + Tanh. Bias is a full-lane [1, hid_pad] f32 vreg add.
    h2 = jnp.tanh(
        jnp.dot(h1.astype(w2_ref.dtype), w2_ref[...],
                preferred_element_type=jnp.float32)
        + b2_ref[...]
    )
    # action_net: Linear (no activation). Unpadded act_dim store (masked vst,
    # far fewer HBM writeback bytes than a 128-lane-padded output).
    out_ref[...] = (
        jnp.dot(h2.astype(w3_ref.dtype), w3_ref[...],
                preferred_element_type=jnp.float32)
        + b3_ref[...]
    )


def prepare_policy_params(params, *, use_bf16=False):
    """One-time parameter prep (call once, reuse every inference call).

    Pads the hidden dimension to 128 lanes (padded lanes stay exactly zero through
    the net: tanh(0) = 0), keeps obs_dim / act_dim unpadded, and optionally casts
    the matmul weights to bf16 (valid on v5e/v6e/v7x; biases stay f32).
    """
    w1, b1, w2, b2, w3, b3 = params
    w1 = jnp.asarray(w1, jnp.float32)
    w2 = jnp.asarray(w2, jnp.float32)
    w3 = jnp.asarray(w3, jnp.float32)

    obs_dim, hidden = w1.shape
    act_dim = w3.shape[1]
    hid_pad = _round_up(hidden, _LANE)

    w1_p = jnp.zeros((obs_dim, hid_pad), jnp.float32).at[:, :hidden].set(w1)
    b1_p = jnp.zeros((1, hid_pad), jnp.float32).at[:, :hidden].set(
        jnp.reshape(jnp.asarray(b1, jnp.float32), (1, hidden)))
    w2_p = jnp.zeros((hid_pad, hid_pad), jnp.float32).at[:hidden, :hidden].set(w2)
    b2_p = jnp.zeros((1, hid_pad), jnp.float32).at[:, :hidden].set(
        jnp.reshape(jnp.asarray(b2, jnp.float32), (1, hidden)))
    w3_p = jnp.zeros((hid_pad, act_dim), jnp.float32).at[:hidden, :].set(w3)
    b3_p = jnp.reshape(jnp.asarray(b3, jnp.float32), (1, act_dim))

    if use_bf16:
        w1_p = w1_p.astype(jnp.bfloat16)
        w2_p = w2_p.astype(jnp.bfloat16)
        w3_p = w3_p.astype(jnp.bfloat16)

    return (w1_p, b1_p, w2_p, b2_p, w3_p, b3_p)


def _choose_batch_tile(batch, batch_tile):
    """Large tiles for throughput, but >=2 grid tiles (v7x 2 TCs) when batch > 8.
    Tiles that are smaller than the batch must be multiples of 8 rows."""
    if batch <= _SUBLANE:
        return batch  # single full-extent tile
    half = _round_up(pl.cdiv(batch, 2), _SUBLANE)
    bt = min(batch_tile, half)
    bt = _round_up(max(bt, _SUBLANE), _SUBLANE)
    if bt >= batch:
        return batch
    return bt


@functools.partial(jax.jit, static_argnames=("batch_tile",))
def onnxable_action_policy(obs, prepared, *, batch_tile=1024):
    """action = action_net(policy_net(obs)); obs is [B, obs_dim].

    `prepared` is the tuple returned by prepare_policy_params (padded once, reused).
    """
    w1_p, b1_p, w2_p, b2_p, w3_p, b3_p = prepared

    batch, obs_dim = obs.shape
    hid_pad = w1_p.shape[1]
    act_dim = w3_p.shape[1]

    # Stream obs in the matmul dtype (bf16 halves streamed bytes when enabled).
    obs = obs.astype(w1_p.dtype)

    bt = _choose_batch_tile(batch, batch_tile)
    grid = (pl.cdiv(batch, bt),)  # partial last block: OOB rows read garbage,
    # compute is row-independent and OOB output rows are dropped.

    w_item = jnp.dtype(w1_p.dtype).itemsize
    flops = 2 * batch * (obs_dim * hid_pad + hid_pad * hid_pad + hid_pad * act_dim)
    transcendentals = 2 * batch * hid_pad
    bytes_accessed = (
        batch * obs_dim * w_item
        + (w1_p.size + w2_p.size + w3_p.size) * w_item
        + (b1_p.size + b2_p.size + b3_p.size) * 4
        + batch * act_dim * 4
    )

    # Weights/biases keep a constant block index -> fetched once, VMEM-resident
    # across all batch tiles; only obs/out stream with the grid.
    def const_spec(a):
        return pl.BlockSpec(a.shape, lambda i: (0,) * a.ndim)

    out = pl.pallas_call(
        _policy_kernel,
        out_shape=jax.ShapeDtypeStruct((batch, act_dim), jnp.float32),
        grid=grid,
        in_specs=[
            pl.BlockSpec((bt, obs_dim), lambda i: (i, 0)),  # obs tile streams over batch
            const_spec(w1_p),
            const_spec(b1_p),
            const_spec(w2_p),
            const_spec(b2_p),
            const_spec(w3_p),
            const_spec(b3_p),
        ],
        out_specs=pl.BlockSpec((bt, act_dim), lambda i: (i, 0)),
        compiler_params=pltpu.CompilerParams(
            dimension_semantics=("parallel",),  # split batch tiles across TCs (v7x)
        ),
        cost_estimate=pl.CostEstimate(
            flops=int(flops),
            transcendentals=int(transcendentals),
            bytes_accessed=int(bytes_accessed),
        ),
    )(obs, w1_p, b1_p, w2_p, b2_p, w3_p, b3_p)

    return out


def _reference(obs, params):
    w1, b1, w2, b2, w3, b3 = params
    h1 = jnp.tanh(obs @ w1 + jnp.reshape(b1, (1, -1)))
    h2 = jnp.tanh(h1 @ w2 + jnp.reshape(b2, (1, -1)))
    return h2 @ w3 + jnp.reshape(b3, (1, -1))


if __name__ == "__main__":
    key = jax.random.PRNGKey(0)

    batch = 8
    obs_dim = 32
    hidden = 64
    act_dim = 8

    k_obs, k1, k2, k3, k4, k5, k6 = jax.random.split(key, 7)

    obs = jax.random.normal(k_obs, (batch, obs_dim), dtype=jnp.float32)

    # Deterministic synthetic parameters (policy_net: 2 layers, action_net: 1 layer).
    params = (
        jax.random.normal(k1, (obs_dim, hidden), dtype=jnp.float32) * 0.1,
        jax.random.normal(k2, (1, hidden), dtype=jnp.float32) * 0.1,
        jax.random.normal(k3, (hidden, hidden), dtype=jnp.float32) * 0.1,
        jax.random.normal(k4, (1, hidden), dtype=jnp.float32) * 0.1,
        jax.random.normal(k5, (hidden, act_dim), dtype=jnp.float32) * 0.1,
        jax.random.normal(k6, (1, act_dim), dtype=jnp.float32) * 0.1,
    )

    # Pad/prepare weights ONCE, outside the per-call inference path.
    prepared = prepare_policy_params(params)

    action = jax.block_until_ready(onnxable_action_policy(obs, prepared))
    expected = _reference(obs, params)
    assert action.shape == (batch, act_dim)
    assert jnp.allclose(action, expected, atol=1e-5, rtol=1e-5)

    # Multi-tile path: batch=600, partial last block, grid >= 2 (both v7x TCs busy).
    big_obs = jax.random.normal(k_obs, (600, obs_dim), dtype=jnp.float32)
    big_out = jax.block_until_ready(onnxable_action_policy(big_obs, prepared))
    assert big_out.shape == (600, act_dim)
    assert jnp.allclose(big_out, _reference(big_obs, params), atol=1e-5, rtol=1e-5)

    # bf16 matmul operands (valid on v5e/v6e/v7x); looser tolerance expected.
    prepared_bf16 = prepare_policy_params(params, use_bf16=True)
    bf16_out = jax.block_until_ready(onnxable_action_policy(big_obs, prepared_bf16))
    assert bf16_out.shape == (600, act_dim)
    assert jnp.max(jnp.abs(bf16_out - _reference(big_obs, params))) < 5e-2

    print("KERNEL_OK")
</pallas_src>

<mosaic_0001>
module attributes {stable_mosaic.version = 11 : i64} {
  func.func @_policy_kernel(%arg0: i32, %arg1: memref<8x32xf32, #tpu.memory_space<vmem>>, %arg2: memref<32x128xf32, #tpu.memory_space<vmem>>, %arg3: memref<1x128xf32, #tpu.memory_space<vmem>>, %arg4: memref<128x128xf32, #tpu.memory_space<vmem>>, %arg5: memref<1x128xf32, #tpu.memory_space<vmem>>, %arg6: memref<128x8xf32, #tpu.memory_space<vmem>>, %arg7: memref<1x8xf32, #tpu.memory_space<vmem>>, %arg8: memref<8x8xf32, #tpu.memory_space<vmem>>) attributes {dimension_semantics = [#tpu.dimension_semantics<parallel>], iteration_bounds = array<i64: 1>, scalar_prefetch = 0 : i64, scratch_operands = 0 : i64, tpu.core_type = #tpu.core_type<tc>, window_params = [{transform_indices = @transform_0, window_bounds = array<i64: 8, 32>}, {pipeline_mode = #tpu.pipeline_mode<synchronous>, transform_indices = @transform_1, window_bounds = array<i64: 32, 128>}, {pipeline_mode = #tpu.pipeline_mode<synchronous>, transform_indices = @transform_2, window_bounds = array<i64: 1, 128>}, {pipeline_mode = #tpu.pipeline_mode<synchronous>, transform_indices = @transform_3, window_bounds = array<i64: 128, 128>}, {pipeline_mode = #tpu.pipeline_mode<synchronous>, transform_indices = @transform_4, window_bounds = array<i64: 1, 128>}, {pipeline_mode = #tpu.pipeline_mode<synchronous>, transform_indices = @transform_5, window_bounds = array<i64: 128, 8>}, {pipeline_mode = #tpu.pipeline_mode<synchronous>, transform_indices = @transform_6, window_bounds = array<i64: 1, 8>}, {transform_indices = @transform_7, window_bounds = array<i64: 8, 8>}]} {
    %c0 = arith.constant 0 : index
    %c0_0 = arith.constant 0 : index
    %0 = vector.load %arg1[%c0, %c0_0] : memref<8x32xf32, #tpu.memory_space<vmem>>, vector<8x32xf32>
    %c0_1 = arith.constant 0 : index
    %c0_2 = arith.constant 0 : index
    %1 = vector.load %arg2[%c0_1, %c0_2] : memref<32x128xf32, #tpu.memory_space<vmem>>, vector<32x128xf32>
    %cst = arith.constant dense<0.000000e+00> : vector<8x128xf32>
    %2 = tpu.matmul %0, %1, %cst {dimension_numbers = #tpu.dot_dimension_numbers<[1], [0], [0], [1], [0, 0, 1, 1], [], []>} : vector<8x32xf32>, vector<32x128xf32>, vector<8x128xf32> -> vector<8x128xf32>
    %c0_3 = arith.constant 0 : index
    %c0_4 = arith.constant 0 : index
    %3 = vector.load %arg3[%c0_3, %c0_4] : memref<1x128xf32, #tpu.memory_space<vmem>>, vector<1x128xf32>
    %4 = vector.broadcast %3 : vector<1x128xf32> to vector<8x128xf32>
    %5 = arith.addf %2, %4 : vector<8x128xf32>
    %6 = math.tanh %5 : vector<8x128xf32>
    %c0_5 = arith.constant 0 : index
    %c0_6 = arith.constant 0 : index
    %7 = vector.load %arg4[%c0_5, %c0_6] : memref<128x128xf32, #tpu.memory_space<vmem>>, vector<128x128xf32>
    %cst_7 = arith.constant dense<0.000000e+00> : vector<8x128xf32>
    %8 = tpu.matmul %6, %7, %cst_7 {dimension_numbers = #tpu.dot_dimension_numbers<[1], [0], [0], [1], [0, 0, 1, 1], [], []>} : vector<8x128xf32>, vector<128x128xf32>, vector<8x128xf32> -> vector<8x128xf32>
    %c0_8 = arith.constant 0 : index
    %c0_9 = arith.constant 0 : index
    %9 = vector.load %arg5[%c0_8, %c0_9] : memref<1x128xf32, #tpu.memory_space<vmem>>, vector<1x128xf32>
    %10 = vector.broadcast %9 : vector<1x128xf32> to vector<8x128xf32>
    %11 = arith.addf %8, %10 : vector<8x128xf32>
    %12 = math.tanh %11 : vector<8x128xf32>
    %c0_10 = arith.constant 0 : index
    %c0_11 = arith.constant 0 : index
    %13 = vector.load %arg6[%c0_10, %c0_11] : memref<128x8xf32, #tpu.memory_space<vmem>>, vector<128x8xf32>
    %cst_12 = arith.constant dense<0.000000e+00> : vector<8x8xf32>
    %14 = tpu.matmul %12, %13, %cst_12 {dimension_numbers = #tpu.dot_dimension_numbers<[1], [0], [0], [1], [0, 0, 1, 1], [], []>} : vector<8x128xf32>, vector<128x8xf32>, vector<8x8xf32> -> vector<8x8xf32>
    %c0_13 = arith.constant 0 : index
    %c0_14 = arith.constant 0 : index
    %15 = vector.load %arg7[%c0_13, %c0_14] : memref<1x8xf32, #tpu.memory_space<vmem>>, vector<1x8xf32>
    %16 = vector.broadcast %15 : vector<1x8xf32> to vector<8x8xf32>
    %17 = arith.addf %14, %16 : vector<8x8xf32>
    %c0_15 = arith.constant 0 : index
    %c0_16 = arith.constant 0 : index
    %18 = vector.load %arg8[%c0_15, %c0_16] : memref<8x8xf32, #tpu.memory_space<vmem>>, vector<8x8xf32>
    tpu.vector_store %arg8[%c0_15, %c0_16], %17 {strides = array<i32>} : memref<8x8xf32, #tpu.memory_space<vmem>>, vector<8x8xf32>,
    return
  }
  func.func @transform_0(%arg0: i32) -> (i32, i32) {
    %c0_i32 = arith.constant 0 : i32
    %c0_i32_0 = arith.constant 0 : i32
    return %arg0, %c0_i32 : i32, i32
  }
  func.func @transform_1(%arg0: i32) -> (i32, i32) {
    %c0_i32 = arith.constant 0 : i32
    %c0_i32_0 = arith.constant 0 : i32
    %c0_i32_1 = arith.constant 0 : i32
    return %c0_i32, %c0_i32_0 : i32, i32
  }
  func.func @transform_2(%arg0: i32) -> (i32, i32) {
    %c0_i32 = arith.constant 0 : i32
    %c0_i32_0 = arith.constant 0 : i32
    %c0_i32_1 = arith.constant 0 : i32
    return %c0_i32, %c0_i32_0 : i32, i32
  }
  func.func @transform_3(%arg0: i32) -> (i32, i32) {
    %c0_i32 = arith.constant 0 : i32
    %c0_i32_0 = arith.constant 0 : i32
    %c0_i32_1 = arith.constant 0 : i32
    return %c0_i32, %c0_i32_0 : i32, i32
  }
  func.func @transform_4(%arg0: i32) -> (i32, i32) {
    %c0_i32 = arith.constant 0 : i32
    %c0_i32_0 = arith.constant 0 : i32
    %c0_i32_1 = arith.constant 0 : i32
    return %c0_i32, %c0_i32_0 : i32, i32
  }
  func.func @transform_5(%arg0: i32) -> (i32, i32) {
    %c0_i32 = arith.constant 0 : i32
    %c0_i32_0 = arith.constant 0 : i32
    %c0_i32_1 = arith.constant 0 : i32
    return %c0_i32, %c0_i32_0 : i32, i32
  }
  func.func @transform_6(%arg0: i32) -> (i32, i32) {
    %c0_i32 = arith.constant 0 : i32
    %c0_i32_0 = arith.constant 0 : i32
    %c0_i32_1 = arith.constant 0 : i32
    return %c0_i32, %c0_i32_0 : i32, i32
  }
  func.func @transform_7(%arg0: i32) -> (i32, i32) {
    %c0_i32 = arith.constant 0 : i32
    %c0_i32_0 = arith.constant 0 : i32
    return %arg0, %c0_i32 : i32, i32
  }
}

</mosaic_0001>

<llo_original>
// kernel: onnxable_action_policy.1
$region0: #{onnxable_action_policy.1}
  #allocation0 [shape = 'u32[]', space=smem, size = 0x4, offset = 0x4, fixed_abs, tag = 'smem constant byte address 0x4 - core index']
  #allocation1 [shape = 'u32[72,128]{1,0:T(1,128)}', space=vmem, size = 0x9000, scoped, tag = 'internal scratch']
  %s0 = inlined_call_operand.vmem [shape: f32[8,32], index: 0, kind: input, shape index: {}]
  %s1 = inlined_call_operand.hbm [shape: f32[32,128], index: 1, kind: input, shape index: {}]
  %s2 = inlined_call_operand.vmem [shape: f32[1,128], index: 2, kind: input, shape index: {}]
  %s3 = inlined_call_operand.vmem [shape: f32[128,128], index: 3, kind: input, shape index: {}]
  %s4 = inlined_call_operand.vmem [shape: f32[1,128], index: 4, kind: input, shape index: {}]
  %s5 = inlined_call_operand.vmem [shape: f32[128,8], index: 5, kind: input, shape index: {}]
  %s6 = inlined_call_operand.vmem [shape: f32[1,8], index: 6, kind: input, shape index: {}]
  %s7 = inlined_call_operand.hbm [shape: f32[8,8], index: 7, kind: output, shape index: {}]
  %s8 = sld [smem:[#allocation0]]
  $region42: #{onnxable_action_policy.1} parent=0
    _
  %s10 = ssub.s32 1, %s8
  %s11 = scalar_select 0, %s10, %s8
  $region1: #{onnxable_action_policy.1} parent=0
    #allocation2 [shape = 'u8[16384]{0}', space=vmem, size = 0x4000, scoped, tag = 'input window, operand 1, single buffered']
    #allocation3 [shape = 's32[1]{0}', space=sflag, size = 0x4, scoped, tag = 'scoped memory for onnxable_action_policy.1']
    #allocation4 [shape = 's32[1]{0}', space=sflag, size = 0x4, scoped, tag = 'scoped memory for onnxable_action_policy.1']
    #allocation5 [shape = 'u8[4096]{0}', space=vmem, size = 0x1000, scoped, tag = 'output window, operand 0, single buffered']
    %12 = vsyncpa [#allocation3], 0
    %13 = vsyncpa [#allocation4], 0
    // Predicated region
    $region2: #{onnxable_action_policy.1} parent=1 // pred_check
      _
    $region3: #{onnxable_action_policy.1} parent=1 // pred_check_branch
      %15 = sbr.rel (0) target = $region5
    $region4: #{onnxable_action_policy.1} parent=1 // pred_region
      _
    $region5: #{onnxable_action_policy.1} parent=1 // pred_fallthru
      _
    // Predicated region
    $region6: #{onnxable_action_policy.1} parent=1 // pred_check
      _
    $region7: #{onnxable_action_policy.1} parent=1 // pred_check_branch
      %17 = sbr.rel (0) target = $region9
    $region8: #{onnxable_action_policy.1} parent=1 // pred_region
      %19 = vsyncadd [#allocation3], 0
      %s20 = sshll.u32 %s1, 4
      %s21 = int_to_ptr.hbm [resolvable:$true] %s20
      %s22 = sshll.u32 [#allocation2], 4
      %s23 = int_to_ptr.vmem [resolvable:$true] %s22
      %28 = dma.hbm_to_vmem [thread:$0]  %s21, 512, %s23, [#allocation3], 128, 128, 8
    $region9: #{onnxable_action_policy.1} parent=1 // pred_fallthru
      _
    // Predicated region
    $region10: #{onnxable_action_policy.1} parent=1 // pred_check
      _
    $region11: #{onnxable_action_policy.1} parent=1 // pred_check_branch
      %30 = sbr.rel (0) target = $region13
    $region12: #{onnxable_action_policy.1} parent=1 // pred_region
      _
    $region13: #{onnxable_action_policy.1} parent=1 // pred_fallthru
      _
    // Predicated region
    $region14: #{onnxable_action_policy.1} parent=1 // pred_check
      _
    $region15: #{onnxable_action_policy.1} parent=1 // pred_check_branch
      %32 = sbr.rel (0) target = $region17
    $region16: #{onnxable_action_policy.1} parent=1 // pred_region
      _
    $region17: #{onnxable_action_policy.1} parent=1 // pred_fallthru
      _
    // Predicated region
    $region18: #{onnxable_action_policy.1} parent=1 // pred_check
      _
    $region19: #{onnxable_action_policy.1} parent=1 // pred_check_branch
      %34 = sbr.rel (0) target = $region21
    $region20: #{onnxable_action_policy.1} parent=1 // pred_region
      _
    $region21: #{onnxable_action_policy.1} parent=1 // pred_fallthru
      _
    // Predicated region
    $region22: #{onnxable_action_policy.1} parent=1 // pred_check
      _
    $region23: #{onnxable_action_policy.1} parent=1 // pred_check_branch
      %36 = sbr.rel (0) target = $region25
    $region24: #{onnxable_action_policy.1} parent=1 // pred_region
      _
    $region25: #{onnxable_action_policy.1} parent=1 // pred_fallthru
      _
    // Predicated region
    $region26: #{onnxable_action_policy.1} parent=1 // pred_check
      _
    $region27: #{onnxable_action_policy.1} parent=1 // pred_check_branch
      %38 = sbr.rel (0) target = $region29
    $region28: #{onnxable_action_policy.1} parent=1 // pred_region
      _
    $region29: #{onnxable_action_policy.1} parent=1 // pred_fallthru
      _
    // Predicated region
    $region30: #{onnxable_action_policy.1} parent=1 // pred_check
      _
    $region31: #{onnxable_action_policy.1} parent=1 // pred_check_branch
      %40 = sbr.rel (0) target = $region33
    $region32: #{onnxable_action_policy.1} parent=1 // pred_region
      %42 = dma.done [#allocation3], 512
    $region33: #{onnxable_action_policy.1} parent=1 // pred_fallthru
      _
    %v43 = vld [vmem:[%s0] sm:$0xff]
    %v44 = vld [vmem:[#allocation2] sm:$0xff]
    %v45 = vld [vmem:[#allocation2 + $0x8] sm:$0xff]
    %v46 = vld [vmem:[#allocation2 + $0x10] sm:$0xff]
    %v47 = vld [vmem:[#allocation2 + $0x18] sm:$0xff]
    %v48 = vld [vmem:[%s2] sm:$0x1]
    %v50 = vperm.slane %v48, 0
    %vm52 = vcmask 261120
    %v54 = vsel %vm52, %v43, 0
    %56 = vmatpush.msra.mxu0 0.0
    %57 = vmatpush.msra.mxu0 0.0
    %58 = vmatpush.msra.mxu0 0.0
    %59 = vmatpush.msra.mxu0 0.0
    %60 = vmatpush.msra.mxu0 0.0
    %61 = vmatpush.msra.mxu0 0.0
    %62 = vmatpush.msra.mxu0 0.0
    %63 = vmatpush.msra.mxu0 0.0
    %64 = vmatpush.msra.mxu0 0.0
    %65 = vmatpush.msra.mxu0 0.0
    %66 = vmatpush.msra.mxu0 0.0
    %67 = vmatpush.msra.mxu0 0.0
    %68 = vmatpush.msra.mxu0 %v47
    %69 = vmatpush.msra.mxu0 %v46
    %70 = vmatpush.msra.mxu0 %v45
    %71 = vmatpush.msra.mxu0 %v44
    %72 = vmatmul.f32.gmra.mxu0 %v54
    %v73 = vpop.f32.mrf.mxu0
    %v74 = vadd.f32 %v50, %v73
    %75 = vdwg.mxu0
    %v76 = vtanh.pop %v74
    %v77 = vld [vmem:[%s3] sm:$0xff]
    %v78 = vld [vmem:[%s3 + $0x8] sm:$0xff]
    %v79 = vld [vmem:[%s3 + $0x10] sm:$0xff]
    %v80 = vld [vmem:[%s3 + $0x18] sm:$0xff]
    %v81 = vld [vmem:[%s3 + $0x20] sm:$0xff]
    %v82 = vld [vmem:[%s3 + $0x28] sm:$0xff]
    %v83 = vld [vmem:[%s3 + $0x30] sm:$0xff]
    %v84 = vld [vmem:[%s3 + $0x38] sm:$0xff]
    %v85 = vld [vmem:[%s3 + $0x40] sm:$0xff]
    %v86 = vld [vmem:[%s3 + $0x48] sm:$0xff]
    %v87 = vld [vmem:[%s3 + $0x50] sm:$0xff]
    %v88 = vld [vmem:[%s3 + $0x58] sm:$0xff]
    %v89 = vld [vmem:[%s3 + $0x60] sm:$0xff]
    %v90 = vld [vmem:[%s3 + $0x68] sm:$0xff]
    %v91 = vld [vmem:[%s3 + $0x70] sm:$0xff]
    %v92 = vld [vmem:[%s3 + $0x78] sm:$0xff]
    %v93 = vld [vmem:[%s4] sm:$0x1]
    %v95 = vperm.slane %v93, 0
    %97 = vmatpush.msra.mxu0 %v92
    %98 = vmatpush.msra.mxu0 %v91
    %99 = vmatpush.msra.mxu0 %v90
    %100 = vmatpush.msra.mxu0 %v89
    %101 = vmatpush.msra.mxu0 %v88
    %102 = vmatpush.msra.mxu0 %v87
    %103 = vmatpush.msra.mxu0 %v86
    %104 = vmatpush.msra.mxu0 %v85
    %105 = vmatpush.msra.mxu0 %v84
    %106 = vmatpush.msra.mxu0 %v83
    %107 = vmatpush.msra.mxu0 %v82
    %108 = vmatpush.msra.mxu0 %v81
    %109 = vmatpush.msra.mxu0 %v80
    %110 = vmatpush.msra.mxu0 %v79
    %111 = vmatpush.msra.mxu0 %v78
    %112 = vmatpush.msra.mxu0 %v77
    %113 = vmatmul.f32.gmra.mxu0 %v76
    %v114 = vpop.f32.mrf.mxu0
    %v115 = vadd.f32 %v95, %v114
    %116 = vdwg.mxu0
    %v117 = vtanh.pop %v115
    %v118 = vld [vmem:[%s5] sm:$0xff]
    %v119 = vld [vmem:[%s5 + $0x8] sm:$0xff]
    %v120 = vld [vmem:[%s5 + $0x10] sm:$0xff]
    %v121 = vld [vmem:[%s5 + $0x18] sm:$0xff]
    %v122 = vld [vmem:[%s5 + $0x20] sm:$0xff]
    %v123 = vld [vmem:[%s5 + $0x28] sm:$0xff]
    %v124 = vld [vmem:[%s5 + $0x30] sm:$0xff]
    %v125 = vld [vmem:[%s5 + $0x38] sm:$0xff]
    %v126 = vld [vmem:[%s5 + $0x40] sm:$0xff]
    %v127 = vld [vmem:[%s5 + $0x48] sm:$0xff]
    %v128 = vld [vmem:[%s5 + $0x50] sm:$0xff]
    %v129 = vld [vmem:[%s5 + $0x58] sm:$0xff]
    %v130 = vld [vmem:[%s5 + $0x60] sm:$0xff]
    %v131 = vld [vmem:[%s5 + $0x68] sm:$0xff]
    %v132 = vld [vmem:[%s5 + $0x70] sm:$0xff]
    %v133 = vld [vmem:[%s5 + $0x78] sm:$0xff]
    %v134 = vld [vmem:[%s6] sm:$0x1]
    %v136 = vperm.slane %v134, 0
    %138 = vmatpush.msra.mxu0 %v133
    %139 = vmatpush.msra.mxu0 %v132
    %140 = vmatpush.msra.mxu0 %v131
    %141 = vmatpush.msra.mxu0 %v130
    %142 = vmatpush.msra.mxu0 %v129
    %143 = vmatpush.msra.mxu0 %v128
    %144 = vmatpush.msra.mxu0 %v127
    %145 = vmatpush.msra.mxu0 %v126
    %146 = vmatpush.msra.mxu0 %v125
    %147 = vmatpush.msra.mxu0 %v124
    %148 = vmatpush.msra.mxu0 %v123
    %149 = vmatpush.msra.mxu0 %v122
    %150 = vmatpush.msra.mxu0 %v121
    %151 = vmatpush.msra.mxu0 %v120
    %152 = vmatpush.msra.mxu0 %v119
    %153 = vmatpush.msra.mxu0 %v118
    %154 = vmatmul.f32.gmra.mxu0 %v117
    %v155 = vpop.f32.mrf.mxu0
    %v156 = vadd.f32 %v136, %v155
    %157 = vdwg.mxu0
    %vm158 = vcmask 64512
    %159 = vst.msk [vmem:[#allocation5] sm:$0xff] %vm158, %v156
    // Predicated region
    $region34: #{onnxable_action_policy.1} parent=1 // pred_check
      _
    $region35: #{onnxable_action_policy.1} parent=1 // pred_check_branch
      %161 = sbr.rel (0) target = $region37
    $region36: #{onnxable_action_policy.1} parent=1 // pred_region
      %163 = vsyncadd [#allocation4], 0
      %s165 = sshll.u32 [#allocation5], 4
      %s166 = int_to_ptr.vmem [resolvable:$true] %s165
      %s167 = sshll.u32 %s7, 4
      %s168 = int_to_ptr.hbm [resolvable:$true] %s167
      %170 = dma.vmem_to_hbm [thread:$0]  %s166, 128, %s168, [#allocation4]
    $region37: #{onnxable_action_policy.1} parent=1 // pred_fallthru
      _
    // Predicated region
    $region38: #{onnxable_action_policy.1} parent=1 // pred_check
      _
    $region39: #{onnxable_action_policy.1} parent=1 // pred_check_branch
      %172 = sbr.rel (0) target = $region41
    $region40: #{onnxable_action_policy.1} parent=1 // pred_region
      %174 = dma.done [#allocation4], 128
    $region41: #{onnxable_action_policy.1} parent=1 // pred_fallthru
      _
    %175 = vsyncpa [#allocation3], 1
    %176 = vsyncpa [#allocation4], 1

</llo_original>
